<compile_context>
chip_gen: v6e
topology: v6e:2x2x1
jax: 0.10.0
libtpu: 0.0.40
codegen_flags: <defaults>
</compile_context>

<pallas_src>
import functools

import jax
import jax.numpy as jnp
from jax.experimental import pallas as pl
from jax.experimental.pallas import tpu as pltpu

NUM_MODALITIES = 5


def _gmu_kernel(x_ref, w_ref, o_ref, *, hidden_size, num_modalities):
    """Fused block-diagonal projection + modality softmax + gated sum.

    x_ref : (TB, D_total)       bf16   batch tile of the concatenated modalities
    w_ref : (D_total, 2*M*H)    bf16   block-diagonal packed [Wh_i^T | Wz_i^T] blocks
    o_ref : (TB, H)             f32    gated output tile
    """
    H = hidden_size
    M = num_modalities

    # Single MXU matmul for all 2*M projections, f32 accumulation.
    proj = jnp.dot(x_ref[...], w_ref[...],
                   preferred_element_type=jnp.float32)      # (TB, 2*M*H)

    def h_pre(i):   # gate-less hidden pre-activation for modality i
        return proj[:, 2 * i * H:(2 * i + 1) * H]

    def z_pre(i):   # gate pre-activation for modality i
        return proj[:, (2 * i + 1) * H:(2 * i + 2) * H]

    # Running max over the modality axis (numerically stable softmax).
    z_max = z_pre(0)
    for i in range(1, M):
        z_max = jnp.maximum(z_max, z_pre(i))

    # Running exp-sum and running weighted accumulate: only ~3 (TB, H)
    # accumulators stay live instead of two (M, TB, H) stacks.
    z_sum = jnp.zeros_like(z_max)
    acc = jnp.zeros_like(z_max)
    for i in range(M):
        e = jnp.exp(z_pre(i) - z_max)
        z_sum = z_sum + e
        acc = acc + e * jnp.tanh(h_pre(i))

    out = acc * pl.reciprocal(z_sum, approx=True)
    o_ref[...] = out.astype(o_ref.dtype)


def pack_gmu_weights(wh_list, wz_list, *, dtype=jnp.bfloat16):
    """Pack the 2*M per-modality nn.Linear weights (each (H, D_i)) into one
    block-diagonal matrix of shape (sum_i D_i, 2*M*H).

    Column layout for modality i: [2iH, 2iH+H) = Wh_i^T block, [2iH+H, 2(i+1)H) = Wz_i^T.
    Done ONCE, outside the per-call (jitted) path.
    """
    M = len(wh_list)
    H = wh_list[0].shape[0]
    d_sizes = [w.shape[1] for w in wh_list]
    d_total = sum(d_sizes)
    w = jnp.zeros((d_total, 2 * M * H), dtype)
    row = 0
    for i, (wh, wz) in enumerate(zip(wh_list, wz_list)):
        d = d_sizes[i]
        w = w.at[row:row + d, 2 * i * H:(2 * i + 1) * H].set(wh.T.astype(dtype))
        w = w.at[row:row + d, (2 * i + 1) * H:(2 * i + 2) * H].set(wz.T.astype(dtype))
        row += d
    return w


@functools.partial(jax.jit,
                   static_argnames=("hidden_size", "num_modalities", "block_b"))
def multimodal_gmu(x_cat, w_packed, *, hidden_size,
                   num_modalities=NUM_MODALITIES, block_b=256):
    """x_cat: (B, sum_i D_i) concatenation of the modality inputs.
    w_packed: output of pack_gmu_weights. Returns (B, hidden_size) f32."""
    B, d_total = x_cat.shape
    two_mh = w_packed.shape[1]
    assert two_mh == 2 * num_modalities * hidden_size

    # bf16 operands halve HBM/VMEM traffic; f32 accumulation inside the kernel.
    x_bf16 = x_cat.astype(jnp.bfloat16)

    tb = min(block_b, B)          # batch tile (block_b is a multiple of 16)
    grid = (pl.cdiv(B, tb),)

    kernel = functools.partial(_gmu_kernel, hidden_size=hidden_size,
                               num_modalities=num_modalities)

    return pl.pallas_call(
        kernel,
        out_shape=jax.ShapeDtypeStruct((B, hidden_size), jnp.float32),
        grid_spec=pltpu.PrefetchScalarGridSpec(
            num_scalar_prefetch=0,
            grid=grid,
            in_specs=[
                # batch-tiled input, auto double-buffered across the grid
                pl.BlockSpec((tb, d_total), lambda b: (b, 0)),
                # packed block-diagonal weights stay resident in VMEM
                pl.BlockSpec((d_total, two_mh), lambda b: (0, 0)),
            ],
            out_specs=pl.BlockSpec((tb, hidden_size), lambda b: (b, 0)),
        ),
        compiler_params=pltpu.CompilerParams(
            dimension_semantics=("parallel",)),   # megacore split on v7x
    )(x_bf16, w_packed)


def reference_gmu(inputs, wh_list, wz_list):
    """Pure-JAX f32 reference mirroring the PyTorch forward (dropout = identity)."""
    hs = [jnp.tanh(x @ w.T) for x, w in zip(inputs, wh_list)]
    zs = [x @ w.T for x, w in zip(inputs, wz_list)]
    z = jnp.stack(zs, axis=0)                      # (5, B, H)
    z_norm = jax.nn.softmax(z, axis=0)             # SoftmaxModified == softmax over modalities
    h = jnp.stack(hs, axis=0)
    return jnp.sum(z_norm * h, axis=0)


if __name__ == "__main__":
    key = jax.random.PRNGKey(0)

    # Small shapes consistent with the module: 5 modalities with different
    # feature sizes, shared hidden size.
    input_size_array = [32, 48, 16, 64, 24]
    hidden_size = 32
    batch = 8

    keys = jax.random.split(key, 1 + 2 * NUM_MODALITIES)
    x_keys = jax.random.split(keys[0], NUM_MODALITIES)

    inputs = [
        jax.random.normal(x_keys[i], (batch, input_size_array[i]), jnp.float32)
        for i in range(NUM_MODALITIES)
    ]
    # nn.Linear(in, hidden, bias=False) stores weight of shape (hidden, in).
    wh_list = [
        jax.random.normal(keys[1 + i], (hidden_size, input_size_array[i]),
                          jnp.float32) * 0.1
        for i in range(NUM_MODALITIES)
    ]
    wz_list = [
        jax.random.normal(keys[1 + NUM_MODALITIES + i],
                          (hidden_size, input_size_array[i]), jnp.float32) * 0.1
        for i in range(NUM_MODALITIES)
    ]

    # One-time packing / concatenation outside the per-call path.
    w_packed = pack_gmu_weights(wh_list, wz_list)
    x_cat = jnp.concatenate(inputs, axis=1)

    out = multimodal_gmu(x_cat, w_packed, hidden_size=hidden_size)
    out = jax.block_until_ready(out)

    ref = reference_gmu(inputs, wh_list, wz_list)
    assert out.shape == (batch, hidden_size)
    # bf16 matmul operands + approx reciprocal -> loosened tolerance vs f32 ref.
    assert jnp.allclose(out, ref, atol=2e-2, rtol=2e-2), (
        f"mismatch vs reference: max abs err {jnp.max(jnp.abs(out - ref))}")

    print("KERNEL_OK")
</pallas_src>

<mosaic_0001>
module attributes {stable_mosaic.version = 11 : i64} {
  func.func @_gmu_kernel(%arg0: i32, %arg1: memref<8x184xbf16, #tpu.memory_space<vmem>>, %arg2: memref<184x320xbf16, #tpu.memory_space<vmem>>, %arg3: memref<8x32xf32, #tpu.memory_space<vmem>>) attributes {dimension_semantics = [#tpu.dimension_semantics<parallel>], iteration_bounds = array<i64: 1>, scalar_prefetch = 0 : i64, scratch_operands = 0 : i64, tpu.core_type = #tpu.core_type<tc>, window_params = [{transform_indices = @transform_0, window_bounds = array<i64: 8, 184>}, {pipeline_mode = #tpu.pipeline_mode<synchronous>, transform_indices = @transform_1, window_bounds = array<i64: 184, 320>}, {transform_indices = @transform_2, window_bounds = array<i64: 8, 32>}]} {
    %c0 = arith.constant 0 : index
    %c0_0 = arith.constant 0 : index
    %0 = vector.load %arg1[%c0, %c0_0] : memref<8x184xbf16, #tpu.memory_space<vmem>>, vector<8x184xbf16>
    %c0_1 = arith.constant 0 : index
    %c0_2 = arith.constant 0 : index
    %1 = vector.load %arg2[%c0_1, %c0_2] : memref<184x320xbf16, #tpu.memory_space<vmem>>, vector<184x320xbf16>
    %cst = arith.constant dense<0.000000e+00> : vector<8x320xf32>
    %2 = tpu.matmul %0, %1, %cst {dimension_numbers = #tpu.dot_dimension_numbers<[1], [0], [0], [1], [0, 0, 1, 1], [], []>} : vector<8x184xbf16>, vector<184x320xbf16>, vector<8x320xf32> -> vector<8x320xf32>
    %3 = vector.extract_strided_slice %2 {offsets = [0, 32], sizes = [8, 32], strides = [1, 1]} : vector<8x320xf32> to vector<8x32xf32>
    %4 = vector.extract_strided_slice %2 {offsets = [0, 96], sizes = [8, 32], strides = [1, 1]} : vector<8x320xf32> to vector<8x32xf32>
    %5 = arith.maximumf %3, %4 : vector<8x32xf32>
    %6 = vector.extract_strided_slice %2 {offsets = [0, 160], sizes = [8, 32], strides = [1, 1]} : vector<8x320xf32> to vector<8x32xf32>
    %7 = arith.maximumf %5, %6 : vector<8x32xf32>
    %8 = vector.extract_strided_slice %2 {offsets = [0, 224], sizes = [8, 32], strides = [1, 1]} : vector<8x320xf32> to vector<8x32xf32>
    %9 = arith.maximumf %7, %8 : vector<8x32xf32>
    %10 = vector.extract_strided_slice %2 {offsets = [0, 288], sizes = [8, 32], strides = [1, 1]} : vector<8x320xf32> to vector<8x32xf32>
    %11 = arith.maximumf %9, %10 : vector<8x32xf32>
    %cst_3 = arith.constant 0.000000e+00 : f32
    %12 = vector.broadcast %cst_3 : f32 to vector<8x32xf32>
    %cst_4 = arith.constant 0.000000e+00 : f32
    %13 = vector.broadcast %cst_4 : f32 to vector<8x32xf32>
    %14 = vector.extract_strided_slice %2 {offsets = [0, 32], sizes = [8, 32], strides = [1, 1]} : vector<8x320xf32> to vector<8x32xf32>
    %15 = arith.subf %14, %11 : vector<8x32xf32>
    %16 = math.exp %15 : vector<8x32xf32>
    %17 = arith.addf %12, %16 : vector<8x32xf32>
    %18 = vector.extract_strided_slice %2 {offsets = [0, 0], sizes = [8, 32], strides = [1, 1]} : vector<8x320xf32> to vector<8x32xf32>
    %19 = math.tanh %18 : vector<8x32xf32>
    %20 = arith.mulf %16, %19 : vector<8x32xf32>
    %21 = arith.addf %13, %20 : vector<8x32xf32>
    %22 = vector.extract_strided_slice %2 {offsets = [0, 96], sizes = [8, 32], strides = [1, 1]} : vector<8x320xf32> to vector<8x32xf32>
    %23 = arith.subf %22, %11 : vector<8x32xf32>
    %24 = math.exp %23 : vector<8x32xf32>
    %25 = arith.addf %17, %24 : vector<8x32xf32>
    %26 = vector.extract_strided_slice %2 {offsets = [0, 64], sizes = [8, 32], strides = [1, 1]} : vector<8x320xf32> to vector<8x32xf32>
    %27 = math.tanh %26 : vector<8x32xf32>
    %28 = arith.mulf %24, %27 : vector<8x32xf32>
    %29 = arith.addf %21, %28 : vector<8x32xf32>
    %30 = vector.extract_strided_slice %2 {offsets = [0, 160], sizes = [8, 32], strides = [1, 1]} : vector<8x320xf32> to vector<8x32xf32>
    %31 = arith.subf %30, %11 : vector<8x32xf32>
    %32 = math.exp %31 : vector<8x32xf32>
    %33 = arith.addf %25, %32 : vector<8x32xf32>
    %34 = vector.extract_strided_slice %2 {offsets = [0, 128], sizes = [8, 32], strides = [1, 1]} : vector<8x320xf32> to vector<8x32xf32>
    %35 = math.tanh %34 : vector<8x32xf32>
    %36 = arith.mulf %32, %35 : vector<8x32xf32>
    %37 = arith.addf %29, %36 : vector<8x32xf32>
    %38 = vector.extract_strided_slice %2 {offsets = [0, 224], sizes = [8, 32], strides = [1, 1]} : vector<8x320xf32> to vector<8x32xf32>
    %39 = arith.subf %38, %11 : vector<8x32xf32>
    %40 = math.exp %39 : vector<8x32xf32>
    %41 = arith.addf %33, %40 : vector<8x32xf32>
    %42 = vector.extract_strided_slice %2 {offsets = [0, 192], sizes = [8, 32], strides = [1, 1]} : vector<8x320xf32> to vector<8x32xf32>
    %43 = math.tanh %42 : vector<8x32xf32>
    %44 = arith.mulf %40, %43 : vector<8x32xf32>
    %45 = arith.addf %37, %44 : vector<8x32xf32>
    %46 = vector.extract_strided_slice %2 {offsets = [0, 288], sizes = [8, 32], strides = [1, 1]} : vector<8x320xf32> to vector<8x32xf32>
    %47 = arith.subf %46, %11 : vector<8x32xf32>
    %48 = math.exp %47 : vector<8x32xf32>
    %49 = arith.addf %41, %48 : vector<8x32xf32>
    %50 = vector.extract_strided_slice %2 {offsets = [0, 256], sizes = [8, 32], strides = [1, 1]} : vector<8x320xf32> to vector<8x32xf32>
    %51 = math.tanh %50 : vector<8x32xf32>
    %52 = arith.mulf %48, %51 : vector<8x32xf32>
    %53 = arith.addf %45, %52 : vector<8x32xf32>
    %54 = tpu.reciprocal %49 {approx = true} : vector<8x32xf32> -> vector<8x32xf32>
    %55 = arith.mulf %53, %54 : vector<8x32xf32>
    %c0_5 = arith.constant 0 : index
    %c0_6 = arith.constant 0 : index
    %56 = vector.load %arg3[%c0_5, %c0_6] : memref<8x32xf32, #tpu.memory_space<vmem>>, vector<8x32xf32>
    tpu.vector_store %arg3[%c0_5, %c0_6], %55 {strides = array<i32>} : memref<8x32xf32, #tpu.memory_space<vmem>>, vector<8x32xf32>,
    return
  }
  func.func @transform_0(%arg0: i32) -> (i32, i32) {
    %c0_i32 = arith.constant 0 : i32
    %c0_i32_0 = arith.constant 0 : i32
    return %arg0, %c0_i32 : i32, i32
  }
  func.func @transform_1(%arg0: i32) -> (i32, i32) {
    %c0_i32 = arith.constant 0 : i32
    %c0_i32_0 = arith.constant 0 : i32
    %c0_i32_1 = arith.constant 0 : i32
    return %c0_i32, %c0_i32_0 : i32, i32
  }
  func.func @transform_2(%arg0: i32) -> (i32, i32) {
    %c0_i32 = arith.constant 0 : i32
    %c0_i32_0 = arith.constant 0 : i32
    return %arg0, %c0_i32 : i32, i32
  }
}

</mosaic_0001>

<llo_original>
// kernel: multimodal_gmu.1
$region0: #{multimodal_gmu.1}
  #allocation0 [shape = 'u32[]', space=smem, size = 0x4, offset = 0x4, fixed_abs, tag = 'smem constant byte address 0x4 - core index']
  #allocation1 [shape = 'u32[144,128]{1,0:T(1,128)}', space=vmem, size = 0x12000, scoped, tag = 'internal scratch']
  %s0 = inlined_call_operand.vmem [shape: bf16[8,184], index: 0, kind: input, shape index: {}]
  %s1 = inlined_call_operand.hbm [shape: bf16[184,320], index: 1, kind: input, shape index: {}]
  %s2 = inlined_call_operand.hbm [shape: f32[8,32], index: 2, kind: output, shape index: {}]
  %s3 = sld [smem:[#allocation0]]
  $region22: #{multimodal_gmu.1} parent=0
    _
  %s5 = ssub.s32 1, %s3
  %s6 = scalar_select 0, %s5, %s3
  $region1: #{multimodal_gmu.1} parent=0
    #allocation2 [shape = 'u8[141312]{0}', space=vmem, size = 0x22800, scoped, tag = 'input window, operand 1, single buffered']
    #allocation3 [shape = 's32[1]{0}', space=sflag, size = 0x4, scoped, tag = 'scoped memory for multimodal_gmu.1']
    #allocation4 [shape = 's32[1]{0}', space=sflag, size = 0x4, scoped, tag = 'scoped memory for multimodal_gmu.1']
    #allocation5 [shape = 'u8[4096]{0}', space=vmem, size = 0x1000, scoped, tag = 'output window, operand 0, single buffered']
    %7 = vsyncpa [#allocation3], 0
    %8 = vsyncpa [#allocation4], 0
    // Predicated region
    $region2: #{multimodal_gmu.1} parent=1 // pred_check
      _
    $region3: #{multimodal_gmu.1} parent=1 // pred_check_branch
      %10 = sbr.rel (0) target = $region5
    $region4: #{multimodal_gmu.1} parent=1 // pred_region
      _
    $region5: #{multimodal_gmu.1} parent=1 // pred_fallthru
      _
    // Predicated region
    $region6: #{multimodal_gmu.1} parent=1 // pred_check
      _
    $region7: #{multimodal_gmu.1} parent=1 // pred_check_branch
      %12 = sbr.rel (0) target = $region9
    $region8: #{multimodal_gmu.1} parent=1 // pred_region
      %s14 = ssub.s32 4416, 4416
      %15 = vsyncadd [#allocation3], %s14
      %s16 = sshll.u32 [#allocation2], 4
      %s17 = int_to_ptr.vmem [resolvable:$true] %s16
      %22 = dma.hbm_to_vmem [thread:$0]  %s1, 4416, %s17, [#allocation3], 192, 192, 12
    $region9: #{multimodal_gmu.1} parent=1 // pred_fallthru
      _
    // Predicated region
    $region10: #{multimodal_gmu.1} parent=1 // pred_check
      _
    $region11: #{multimodal_gmu.1} parent=1 // pred_check_branch
      %24 = sbr.rel (0) target = $region13
    $region12: #{multimodal_gmu.1} parent=1 // pred_region
      %25 = dma.done [#allocation3], 4416
    $region13: #{multimodal_gmu.1} parent=1 // pred_fallthru
      _
    %v27 = vld [vmem:[%s0] sm:$0xff]
    %v28 = vld [vmem:[#allocation2] sm:$0xff]
    %v29 = vld [vmem:[#allocation2 + $0x8] sm:$0xf]
    %v30 = vld [vmem:[#allocation2 + $0xc] sm:$0xff]
    %v31 = vld [vmem:[#allocation2 + $0x14] sm:$0xf]
    %v32 = vld [vmem:[#allocation2 + $0x18] sm:$0xff]
    %v33 = vld [vmem:[#allocation2 + $0x20] sm:$0xf]
    %v34 = vld [vmem:[#allocation2 + $0x24] sm:$0xff]
    %v35 = vld [vmem:[#allocation2 + $0x2c] sm:$0xf]
    %v36 = vld [vmem:[#allocation2 + $0x30] sm:$0xff]
    %v37 = vld [vmem:[#allocation2 + $0x38] sm:$0xf]
    %v38 = vld [vmem:[#allocation2 + $0x3c] sm:$0xff]
    %v39 = vld [vmem:[#allocation2 + $0x44] sm:$0xf]
    %v40 = vld [vmem:[#allocation2 + $0x48] sm:$0xff]
    %v41 = vld [vmem:[#allocation2 + $0x50] sm:$0xf]
    %v42 = vld [vmem:[#allocation2 + $0x54] sm:$0xff]
    %v43 = vld [vmem:[#allocation2 + $0x5c] sm:$0xf]
    %v44 = vld [vmem:[#allocation2 + $0x60] sm:$0xff]
    %v45 = vld [vmem:[#allocation2 + $0x68] sm:$0xf]
    %v46 = vld [vmem:[#allocation2 + $0x6c] sm:$0xff]
    %v47 = vld [vmem:[#allocation2 + $0x74] sm:$0xf]
    %v48 = vld [vmem:[#allocation2 + $0x78] sm:$0xff]
    %v49 = vld [vmem:[#allocation2 + $0x80] sm:$0xf]
    %v50 = vld [vmem:[#allocation2 + $0x84] sm:$0xff]
    %v51 = vld [vmem:[#allocation2 + $0x8c] sm:$0xf]
    %v52 = vld [vmem:[#allocation2 + $0x90] sm:$0xff]
    %v53 = vld [vmem:[#allocation2 + $0x98] sm:$0xf]
    %v54 = vld [vmem:[#allocation2 + $0x9c] sm:$0xff]
    %v55 = vld [vmem:[#allocation2 + $0xa4] sm:$0xf]
    %v56 = vld [vmem:[#allocation2 + $0xa8] sm:$0xff]
    %v57 = vld [vmem:[#allocation2 + $0xb0] sm:$0xf]
    %v58 = vld [vmem:[#allocation2 + $0xb4] sm:$0xff]
    %v59 = vld [vmem:[#allocation2 + $0xbc] sm:$0xf]
    %v60 = vld [vmem:[#allocation2 + $0xc0] sm:$0xff]
    %v61 = vld [vmem:[#allocation2 + $0xc8] sm:$0xf]
    %v62 = vld [vmem:[#allocation2 + $0xcc] sm:$0xff]
    %v63 = vld [vmem:[#allocation2 + $0xd4] sm:$0xf]
    %v64 = vld [vmem:[#allocation2 + $0xd8] sm:$0xff]
    %v65 = vld [vmem:[#allocation2 + $0xe0] sm:$0xf]
    %v66 = vld [vmem:[#allocation2 + $0xe4] sm:$0xff]
    %v67 = vld [vmem:[#allocation2 + $0xec] sm:$0xf]
    %v68 = vld [vmem:[#allocation2 + $0xf0] sm:$0xff]
    %v69 = vld [vmem:[#allocation2 + $0xf8] sm:$0xf]
    %v70 = vld [vmem:[#allocation2 + $0xfc] sm:$0xff]
    %v71 = vld [vmem:[#allocation2 + $0x104] sm:$0xf]
    %v72 = vld [vmem:[#allocation2 + $0x108] sm:$0xff]
    %v73 = vld [vmem:[#allocation2 + $0x110] sm:$0xf]
    %v75 = vunpack.c.l.b16 %v27
    %v76 = vunpack.c.h.b16 %v27
    %v77 = vpack.c.b16 %v75, %v75
    %v78 = vpack.c.b16 %v76, %v76
    %v126 = vunpack.c.l.b16 %v28
    %v127 = vunpack.c.h.b16 %v28
    %v128 = vunpack.c.l.b16 %v29
    %v129 = vunpack.c.l.b16 %v30
    %v130 = vunpack.c.h.b16 %v30
    %v131 = vunpack.c.l.b16 %v31
    %v132 = vunpack.c.l.b16 %v32
    %v133 = vunpack.c.h.b16 %v32
    %v134 = vunpack.c.l.b16 %v33
    %v135 = vunpack.c.l.b16 %v34
    %v136 = vunpack.c.h.b16 %v34
    %v137 = vunpack.c.l.b16 %v35
    %v138 = vunpack.c.l.b16 %v36
    %v139 = vunpack.c.h.b16 %v36
    %v140 = vunpack.c.l.b16 %v37
    %v141 = vunpack.c.l.b16 %v38
    %v142 = vunpack.c.h.b16 %v38
    %v143 = vunpack.c.l.b16 %v39
    %v144 = vunpack.c.l.b16 %v40
    %v145 = vunpack.c.h.b16 %v40
    %v146 = vunpack.c.l.b16 %v41
    %v147 = vunpack.c.l.b16 %v42
    %v148 = vunpack.c.h.b16 %v42
    %v149 = vunpack.c.l.b16 %v43
    %v150 = vunpack.c.l.b16 %v44
    %v151 = vunpack.c.h.b16 %v44
    %v152 = vunpack.c.l.b16 %v45
    %v153 = vunpack.c.l.b16 %v46
    %v154 = vunpack.c.h.b16 %v46
    %v155 = vunpack.c.l.b16 %v47
    %v156 = vunpack.c.l.b16 %v48
    %v157 = vunpack.c.h.b16 %v48
    %v158 = vunpack.c.l.b16 %v49
    %v159 = vunpack.c.l.b16 %v50
    %v160 = vunpack.c.h.b16 %v50
    %v161 = vunpack.c.l.b16 %v51
    %v162 = vunpack.c.l.b16 %v52
    %v163 = vunpack.c.h.b16 %v52
    %v164 = vunpack.c.l.b16 %v53
    %v165 = vunpack.c.l.b16 %v54
    %v166 = vunpack.c.h.b16 %v54
    %v167 = vunpack.c.l.b16 %v55
    %v168 = vunpack.c.l.b16 %v56
    %v169 = vunpack.c.h.b16 %v56
    %v170 = vunpack.c.l.b16 %v57
    %v171 = vunpack.c.l.b16 %v58
    %v172 = vunpack.c.h.b16 %v58
    %v173 = vunpack.c.l.b16 %v59
    %v174 = vunpack.c.l.b16 %v60
    %v175 = vunpack.c.h.b16 %v60
    %v176 = vunpack.c.l.b16 %v61
    %v177 = vunpack.c.l.b16 %v62
    %v178 = vunpack.c.h.b16 %v62
    %v179 = vunpack.c.l.b16 %v63
    %v180 = vunpack.c.l.b16 %v64
    %v181 = vunpack.c.h.b16 %v64
    %v182 = vunpack.c.l.b16 %v65
    %v183 = vunpack.c.l.b16 %v66
    %v184 = vunpack.c.h.b16 %v66
    %v185 = vunpack.c.l.b16 %v67
    %v186 = vunpack.c.l.b16 %v68
    %v187 = vunpack.c.h.b16 %v68
    %v188 = vunpack.c.l.b16 %v69
    %v189 = vunpack.c.l.b16 %v70
    %v190 = vunpack.c.h.b16 %v70
    %v191 = vunpack.c.l.b16 %v71
    %v192 = vunpack.c.l.b16 %v72
    %v193 = vunpack.c.h.b16 %v72
    %v194 = vunpack.c.l.b16 %v73
    %v195 = vpack.c.b16 %v129, %v126
    %v196 = vpack.c.b16 %v130, %v127
    %v197 = vpack.c.b16 %v131, %v128
    %v198 = vpack.c.b16 %v135, %v132
    %v199 = vpack.c.b16 %v136, %v133
    %v200 = vpack.c.b16 %v137, %v134
    %v201 = vpack.c.b16 %v141, %v138
    %v202 = vpack.c.b16 %v142, %v139
    %v203 = vpack.c.b16 %v143, %v140
    %v204 = vpack.c.b16 %v147, %v144
    %v205 = vpack.c.b16 %v148, %v145
    %v206 = vpack.c.b16 %v149, %v146
    %v207 = vpack.c.b16 %v153, %v150
    %v208 = vpack.c.b16 %v154, %v151
    %v209 = vpack.c.b16 %v155, %v152
    %v210 = vpack.c.b16 %v159, %v156
    %v211 = vpack.c.b16 %v160, %v157
    %v212 = vpack.c.b16 %v161, %v158
    %v213 = vpack.c.b16 %v165, %v162
    %v214 = vpack.c.b16 %v166, %v163
    %v215 = vpack.c.b16 %v167, %v164
    %v216 = vpack.c.b16 %v171, %v168
    %v217 = vpack.c.b16 %v172, %v169
    %v218 = vpack.c.b16 %v173, %v170
    %v219 = vpack.c.b16 %v177, %v174
    %v220 = vpack.c.b16 %v178, %v175
    %v221 = vpack.c.b16 %v179, %v176
    %v222 = vpack.c.b16 %v183, %v180
    %v223 = vpack.c.b16 %v184, %v181
    %v224 = vpack.c.b16 %v185, %v182
    %v225 = vpack.c.b16 %v189, %v186
    %v226 = vpack.c.b16 %v190, %v187
    %v227 = vpack.c.b16 %v191, %v188
    %v228 = vpack.c.b16 %v192, %v192
    %v229 = vpack.c.b16 %v193, %v193
    %v230 = vpack.c.b16 %v194, %v194
    %vm264 = vcmask 457728
    %v266 = vsel %vm264, %v78, 0
    %vm268 = vcmask 1043456
    %v270 = vsel %vm268, %v228, 0
    %v273 = vsel %vm268, %v229, 0
    %v276 = vsel %vm268, %v230, 0
    %278 = vmatprep.subr.bf16.mxu0 %v217
    %279 = vmatpush1.bf16.msra.mxu0 %v216
    %280 = vmatprep.subr.bf16.mxu0 %v214
    %281 = vmatpush1.bf16.msra.mxu0 %v213
    %282 = vmatprep.subr.bf16.mxu0 %v211
    %283 = vmatpush1.bf16.msra.mxu0 %v210
    %284 = vmatprep.subr.bf16.mxu0 %v208
    %285 = vmatpush1.bf16.msra.mxu0 %v207
    %286 = vmatprep.subr.bf16.mxu0 %v205
    %287 = vmatpush1.bf16.msra.mxu0 %v204
    %288 = vmatprep.subr.bf16.mxu0 %v202
    %289 = vmatpush1.bf16.msra.mxu0 %v201
    %290 = vmatprep.subr.bf16.mxu0 %v199
    %291 = vmatpush1.bf16.msra.mxu0 %v198
    %292 = vmatprep.subr.bf16.mxu0 %v196
    %293 = vmatpush1.bf16.msra.mxu0 %v195
    %294 = vmatprep.subr.bf16.mxu0 0
    %295 = vmatpush2.bf16.msra.mxu0 0
    %296 = vmatprep.subr.bf16.mxu0 0
    %297 = vmatpush2.bf16.msra.mxu0 0
    %298 = vmatprep.subr.bf16.mxu0 0
    %299 = vmatpush2.bf16.msra.mxu0 0
    %300 = vmatprep.subr.bf16.mxu0 0
    %301 = vmatpush2.bf16.msra.mxu0 0
    %302 = vmatprep.subr.bf16.mxu0 %v273
    %303 = vmatpush2.bf16.msra.mxu0 %v270
    %304 = vmatprep.subr.bf16.mxu0 %v226
    %305 = vmatpush2.bf16.msra.mxu0 %v225
    %306 = vmatprep.subr.bf16.mxu0 %v223
    %307 = vmatpush2.bf16.msra.mxu0 %v222
    %308 = vmatprep.subr.bf16.mxu0 %v220
    %309 = vmatpush2.bf16.msra.mxu0 %v219
    %310 = vmatprep.mubr.bf16.mxu0 %v266
    %311 = vmatmul.mubr.bf16.gmra.mxu0 %v77
    %v312 = vpop.f32.mrf.mxu0
    %v313 = vadd.f32 0.0, %v312
    %v314 = vpop.f32.mrf.mxu0
    %v315 = vadd.f32 0.0, %v314
    %v316 = vpop.f32.mrf.mxu0
    %v317 = vpop.f32.mrf.mxu0
    %318 = vdwg.mxu0
    %319 = vmatprep.subr.bf16.mxu0 0
    %320 = vmatpush1.bf16.msra.mxu0 %v218
    %321 = vmatprep.subr.bf16.mxu0 0
    %322 = vmatpush1.bf16.msra.mxu0 %v215
    %323 = vmatprep.subr.bf16.mxu0 0
    %324 = vmatpush1.bf16.msra.mxu0 %v212
    %325 = vmatprep.subr.bf16.mxu0 0
    %326 = vmatpush1.bf16.msra.mxu0 %v209
    %327 = vmatprep.subr.bf16.mxu0 0
    %328 = vmatpush1.bf16.msra.mxu0 %v206
    %329 = vmatprep.subr.bf16.mxu0 0
    %330 = vmatpush1.bf16.msra.mxu0 %v203
    %331 = vmatprep.subr.bf16.mxu0 0
    %332 = vmatpush1.bf16.msra.mxu0 %v200
    %333 = vmatprep.subr.bf16.mxu0 0
    %334 = vmatpush1.bf16.msra.mxu0 %v197
    %335 = vmatprep.subr.bf16.mxu0 0
    %336 = vmatpush2.bf16.msra.mxu0 0
    %337 = vmatprep.subr.bf16.mxu0 0
    %338 = vmatpush2.bf16.msra.mxu0 0
    %339 = vmatprep.subr.bf16.mxu0 0
    %340 = vmatpush2.bf16.msra.mxu0 0
    %341 = vmatprep.subr.bf16.mxu0 0
    %342 = vmatpush2.bf16.msra.mxu0 0
    %343 = vmatprep.subr.bf16.mxu0 0
    %344 = vmatpush2.bf16.msra.mxu0 %v276
    %345 = vmatprep.subr.bf16.mxu0 0
    %346 = vmatpush2.bf16.msra.mxu0 %v227
    %347 = vmatprep.subr.bf16.mxu0 0
    %348 = vmatpush2.bf16.msra.mxu0 %v224
    %349 = vmatprep.subr.bf16.mxu0 0
    %350 = vmatpush2.bf16.msra.mxu0 %v221
    %351 = vmatprep.mubr.bf16.mxu0 %v266
    %352 = vmatmul.mubr.bf16.gmra.mxu0 %v77
    %v353 = vpop.f32.mrf.mxu0
    %v354 = vadd.f32 0.0, %v353
    %v355 = vpop.f32.mrf.mxu0
    %v356 = vpop.f32.mrf.mxu0
    %v357 = vpop.f32.mrf.mxu0
    %358 = vdwg.mxu0
    %360 = vrot.lane.b32.xlu0 %v313, 64
    %v361 = vpop.permute.xlu0 %360
    %v363 = vmax.f32 %v313, %v361
    %v364 = vmax.f32 %v363, %v315
    %366 = vrot.lane.b32.xlu0 %v315, 64
    %v367 = vpop.permute.xlu0 %366
    %v369 = vmax.f32 %v364, %v367
    %v370 = vmax.f32 %v369, %v354
    %v371 = vsub.f32 %v313, %v370
    %v372 = vmul.f32 %v371, 1.442695
    %v373 = vpow.pop %v372
    %v374 = vadd.f32 %v373, 0.0
    %v375 = vtanh.pop %v313
    %377 = vrot.lane.b32.xlu0 %v375, 32
    %v378 = vpop.permute.xlu0 %377
    %v380 = vmul.f32 %v373, %v378
    %v381 = vadd.f32 %v380, 0.0
    %383 = vrot.lane.b32.xlu0 %v370, 64
    %v384 = vpop.permute.xlu0 %383
    %v386 = vsub.f32 %v313, %v384
    %v387 = vmul.f32 %v386, 1.442695
    %v388 = vpow.pop %v387
    %390 = vrot.lane.b32.xlu0 %v388, 64
    %v391 = vpop.permute.xlu0 %390
    %v393 = vadd.f32 %v374, %v391
    %v394 = vmul.f32 %v388, %v378
    %396 = vrot.lane.b32.xlu0 %v394, 64
    %v397 = vpop.permute.xlu0 %396
    %v399 = vadd.f32 %v381, %v397
    %v400 = vsub.f32 %v315, %v370
    %v401 = vmul.f32 %v400, 1.442695
    %v402 = vpow.pop %v401
    %v403 = vadd.f32 %v393, %v402
    %v404 = vtanh.pop %v315
    %406 = vrot.lane.b32.xlu0 %v404, 32
    %v407 = vpop.permute.xlu0 %406
    %v409 = vmul.f32 %v402, %v407
    %v410 = vadd.f32 %v399, %v409
    %v411 = vsub.f32 %v315, %v384
    %v412 = vmul.f32 %v411, 1.442695
    %v413 = vpow.pop %v412
    %415 = vrot.lane.b32.xlu0 %v413, 64
    %v416 = vpop.permute.xlu0 %415
    %v418 = vadd.f32 %v403, %v416
    %v419 = vmul.f32 %v413, %v407
    %421 = vrot.lane.b32.xlu0 %v419, 64
    %v422 = vpop.permute.xlu0 %421
    %v424 = vadd.f32 %v410, %v422
    %v425 = vsub.f32 %v354, %v370
    %v426 = vmul.f32 %v425, 1.442695
    %v427 = vpow.pop %v426
    %v428 = vadd.f32 %v418, %v427
    %v429 = vtanh.pop %v354
    %431 = vrot.lane.b32.xlu0 %v429, 32
    %v432 = vpop.permute.xlu0 %431
    %v434 = vmul.f32 %v427, %v432
    %v435 = vadd.f32 %v424, %v434
    %v436 = vrcp.pop %v428
    %v437 = vmul.f32 %v435, %v436
    %439 = vrot.lane.b32.xlu0 %v437, 96
    %v440 = vpop.permute.xlu0 %439
    %vm442 = vcmask 261120
    %443 = vst.msk [vmem:[#allocation5] sm:$0xff] %vm442, %v440
    // Predicated region
    $region14: #{multimodal_gmu.1} parent=1 // pred_check
      _
    $region15: #{multimodal_gmu.1} parent=1 // pred_check_branch
      %445 = sbr.rel (0) target = $region17
    $region16: #{multimodal_gmu.1} parent=1 // pred_region
      %s447 = ssub.s32 128, 128
      %448 = vsyncadd [#allocation4], %s447
      %s450 = sshll.u32 [#allocation5], 4
      %s451 = int_to_ptr.vmem [resolvable:$true] %s450
      %453 = dma.vmem_to_hbm [thread:$0]  %s451, 128, %s2, [#allocation4]
    $region17: #{multimodal_gmu.1} parent=1 // pred_fallthru
      _
    // Predicated region
    $region18: #{multimodal_gmu.1} parent=1 // pred_check
      _
    $region19: #{multimodal_gmu.1} parent=1 // pred_check_branch
      %455 = sbr.rel (0) target = $region21
    $region20: #{multimodal_gmu.1} parent=1 // pred_region
      %456 = dma.done [#allocation4], 128
    $region21: #{multimodal_gmu.1} parent=1 // pred_fallthru
      _
    %457 = vsyncpa [#allocation3], 1
    %458 = vsyncpa [#allocation4], 1

</llo_original>
